<compile_context>
chip_gen: v5e
topology: v5e:2x2
jax: 0.10.0
libtpu: 0.0.40
codegen_flags: <defaults>
</compile_context>

<pallas_src>
import jax
import jax.numpy as jnp
from jax import lax
from jax.experimental import pallas as pl
from jax.experimental.pallas import tpu as pltpu


# ---------------------------------------------------------------------------
# Kernel bodies
# ---------------------------------------------------------------------------

def _mlp_kernel_narrow_small(x_ref, w1_ref, b1_ref, w2r_ref, b2_ref, o_ref):
    """Gridless path, out_size == 1: fc1 on the MXU, fc2 as VPU mul + XLU reduce."""
    x = x_ref[...].astype(w1_ref.dtype)
    h = jnp.dot(x, w1_ref[...], preferred_element_type=jnp.float32)
    h = jnp.maximum(h + b1_ref[...], 0.0)                       # f32 epilogue (v5e-safe)
    w2r = w2r_ref[...].astype(jnp.float32)                      # (1, H)
    y = jnp.sum(h * w2r, axis=-1, keepdims=True) + b2_ref[0]    # (B, 1)
    o_ref[...] = y.astype(o_ref.dtype)


def _mlp_kernel_wide_small(x_ref, w1_ref, b1_ref, w2_ref, b2_ref, o_ref):
    """Gridless path, general output width: both layers on the MXU."""
    x = x_ref[...].astype(w1_ref.dtype)
    h = jnp.dot(x, w1_ref[...], preferred_element_type=jnp.float32)
    h = jnp.maximum(h + b1_ref[...], 0.0)
    y = jnp.dot(h.astype(w2_ref.dtype), w2_ref[...],
                preferred_element_type=jnp.float32) + b2_ref[...]
    o_ref[...] = y.astype(o_ref.dtype)


def _mlp_kernel_wide_tiled(x_ref, w1_ref, b1_ref, w2_ref, b2_ref, o_ref):
    """Batch-tiled path: x/out stream over the grid; weights stay VMEM-resident."""
    x = x_ref[...].astype(w1_ref.dtype)
    h = jnp.dot(x, w1_ref[...], preferred_element_type=jnp.float32)
    h = jnp.maximum(h + b1_ref[...], 0.0)                       # f32 epilogue
    y = jnp.dot(h.astype(w2_ref.dtype), w2_ref[...],
                preferred_element_type=jnp.float32) + b2_ref[...]
    o_ref[...] = y.astype(o_ref.dtype)


def _mlp_kernel_narrow_tiled(x_ref, w1_ref, b1_ref, w2r_ref, b2_ref, o_ref):
    """Batch-tiled path, out_size == 1, lane-dense output.

    fc2 is computed as (1, H) contracted against (tB, H) on the MXU so the
    per-tile result is a lane-dense (1, tB) row instead of a (tB, 1) column.
    """
    x = x_ref[...].astype(w1_ref.dtype)
    h = jnp.dot(x, w1_ref[...], preferred_element_type=jnp.float32)
    h = jnp.maximum(h + b1_ref[...], 0.0)                       # f32 epilogue
    y = lax.dot_general(w2r_ref[...], h.astype(w2r_ref.dtype),
                        (((1,), (1,)), ((), ())),
                        preferred_element_type=jnp.float32)     # (1, tB)
    y = y + b2_ref[0]
    o_ref[...] = y.reshape(o_ref.shape).astype(o_ref.dtype)


# ---------------------------------------------------------------------------
# Parameter preparation (one-time; removes all per-call layout work)
# ---------------------------------------------------------------------------

def prepare_params(w1, b1, w2, b2, *, use_bf16_matmul=False):
    """Lay parameters out for the Pallas forward. Call ONCE at init time.

    Layout contract (transposed vs. torch nn.Linear.weight):
      w1: (In, H), b1: (H,)/(1, H), w2: (H, Out), b2: (Out,)/(1, Out)
    """
    In, H = w1.shape
    H2, Out = w2.shape
    if H2 != H:
        raise ValueError(f"w2 must be (hidden, out); got w1={w1.shape}, w2={w2.shape}")
    mm_dtype = jnp.bfloat16 if use_bf16_matmul else jnp.float32
    params = {
        "w1": jnp.asarray(w1, mm_dtype),
        "b1": jnp.asarray(b1, jnp.float32).reshape(1, H),
        "narrow": Out == 1,
        "sizes": (In, H, Out),
    }
    if Out == 1:
        # (H, 1) -> (1, H) lane-major row, done here once instead of per call.
        params["w2"] = jnp.asarray(w2, mm_dtype).reshape(1, H)
        params["b2"] = jnp.asarray(b2, jnp.float32).reshape(1,)   # SMEM scalar
    else:
        params["w2"] = jnp.asarray(w2, mm_dtype)
        params["b2"] = jnp.asarray(b2, jnp.float32).reshape(1, Out)
    return params


# ---------------------------------------------------------------------------
# Forward wrapper
# ---------------------------------------------------------------------------

_VMEM_BUDGET_BYTES = 48 * 1024 * 1024    # conservative working budget (v7x: 64 MiB physical)
_SMALL_PATH_MAX_BYTES = 2 * 1024 * 1024
_SMALL_PATH_MAX_BATCH = 256


def _pick_batch_tile(B, In, Out, x_itemsize, out_itemsize, resident_bytes):
    budget = _VMEM_BUDGET_BYTES - 2 * resident_bytes             # weights are double-buffered too
    cap = max(128, B // 2)          # keep >= 2 grid steps so v7x's 2nd TensorCore gets work
    tb = 8
    for cand in (1024, 512, 256, 128, 64, 32, 16, 8):
        if cand > cap:
            continue
        if 2 * cand * (In * x_itemsize + Out * out_itemsize) <= budget:
            tb = cand
            break
    # TODO(synk): add K/N (feature-dim) tiling if even an 8-row batch tile plus the
    # fully-resident weights overflow VMEM.
    return min(tb, max(8, -(-B // 8) * 8))


def simple_double_model(x, params):
    """Pallas forward of SimpleDoubleModel: fc2(relu(fc1(x))).  x: (B, In) f32."""
    assert x.ndim == 2
    B = x.shape[0]
    In, H, Out = params["sizes"]
    assert x.shape[1] == In
    narrow = params["narrow"]
    w1, b1, w2, b2 = params["w1"], params["b1"], params["w2"], params["b2"]
    out_dtype = x.dtype
    out_itemsize = jnp.dtype(out_dtype).itemsize

    resident_bytes = sum(int(a.size) * a.dtype.itemsize for a in (w1, b1, w2, b2))
    small_bytes = (resident_bytes + x.size * x.dtype.itemsize + B * Out * out_itemsize)

    vmem = pl.BlockSpec(memory_space=pltpu.MemorySpace.VMEM)
    smem = pl.BlockSpec(memory_space=pltpu.MemorySpace.SMEM)

    # ---- toy / small path: whole arrays VMEM-resident, no grid, no pipeline ----
    if B <= _SMALL_PATH_MAX_BATCH and small_bytes <= _SMALL_PATH_MAX_BYTES:
        kernel = _mlp_kernel_narrow_small if narrow else _mlp_kernel_wide_small
        in_specs = [vmem, vmem, vmem, vmem, smem if narrow else vmem]
        return pl.pallas_call(
            kernel,
            out_shape=jax.ShapeDtypeStruct((B, Out), out_dtype),
            in_specs=in_specs,
            out_specs=vmem,
        )(x, w1, b1, w2, b2)

    # ---- tiled path: stream batch tiles; weights fetched once (constant index_map) ----
    tb = _pick_batch_tile(B, In, Out, x.dtype.itemsize, out_itemsize, resident_bytes)
    n_tiles = pl.cdiv(B, tb)

    est_vmem = 2 * resident_bytes + 2 * tb * (In * x.dtype.itemsize + Out * out_itemsize)
    vmem_limit = None if est_vmem <= (16 << 20) else int(est_vmem + (4 << 20))
    cparams = pltpu.CompilerParams(
        dimension_semantics=("parallel",),   # v7x: shard batch tiles across both TCs
        vmem_limit_bytes=vmem_limit,
    )

    x_spec = pl.BlockSpec((tb, In), lambda i: (i, 0))
    w1_spec = pl.BlockSpec(w1.shape, lambda i: (0, 0))   # constant -> DMA'd once
    b1_spec = pl.BlockSpec(b1.shape, lambda i: (0, 0))
    w2_spec = pl.BlockSpec(w2.shape, lambda i: (0, 0))

    if narrow:
        out = pl.pallas_call(
            _mlp_kernel_narrow_tiled,
            out_shape=jax.ShapeDtypeStruct((n_tiles, 1, tb), out_dtype),
            grid=(n_tiles,),
            in_specs=[x_spec, w1_spec, b1_spec, w2_spec, smem],
            out_specs=pl.BlockSpec((1, 1, tb), lambda i: (i, 0, 0)),
            compiler_params=cparams,
        )(x, w1, b1, w2, b2)
        return out.reshape(n_tiles * tb, 1)[:B]

    out = pl.pallas_call(
        _mlp_kernel_wide_tiled,
        out_shape=jax.ShapeDtypeStruct((B, Out), out_dtype),
        grid=(n_tiles,),
        in_specs=[x_spec, w1_spec, b1_spec, w2_spec,
                  pl.BlockSpec(b2.shape, lambda i: (0, 0))],
        out_specs=pl.BlockSpec((tb, Out), lambda i: (i, 0)),
        compiler_params=cparams,
    )(x, w1, b1, w2, b2)
    return out


# ---------------------------------------------------------------------------
# Demo / correctness checks
# ---------------------------------------------------------------------------

if __name__ == "__main__":
    def init_params(key, In, H, Out, use_bf16=False):
        k1, k2, k3, k4 = jax.random.split(key, 4)
        bound1 = 1.0 / jnp.sqrt(In)
        w1 = jax.random.uniform(k1, (In, H), jnp.float32, -bound1, bound1)
        b1 = jax.random.uniform(k2, (1, H), jnp.float32, -bound1, bound1)
        bound2 = 1.0 / jnp.sqrt(H)
        w2 = jax.random.uniform(k3, (H, Out), jnp.float32, -bound2, bound2)
        b2 = jax.random.uniform(k4, (1, Out), jnp.float32, -bound2, bound2)
        return (w1, b1, w2, b2), prepare_params(w1, b1, w2, b2, use_bf16_matmul=use_bf16)

    def ref_forward(x, w1, b1, w2, b2, mm_dtype=jnp.float32):
        h = jnp.dot(x.astype(mm_dtype), w1.astype(mm_dtype),
                    preferred_element_type=jnp.float32)
        h = jnp.maximum(h + b1, 0.0)
        y = jnp.dot(h.astype(mm_dtype), w2.astype(mm_dtype),
                    preferred_element_type=jnp.float32)
        return y + b2

    key = jax.random.PRNGKey(0)
    k1, k2, k3, k4, k5, k6 = jax.random.split(key, 6)

    # 1) Toy shape (matches the original module demo) -> gridless narrow path.
    (w1, b1, w2, b2), params = init_params(k1, 32, 32, 1)
    x = jax.random.normal(k2, (8, 32), jnp.float32)
    out = jax.block_until_ready(simple_double_model(x, params))
    ref = ref_forward(x, w1, b1, w2, b2)
    assert out.shape == (8, 1)
    assert jnp.allclose(out, ref, atol=1e-5, rtol=1e-5)

    # 2) Large batch, out_size==1 -> batch-tiled narrow path (lane-dense output slab).
    (w1, b1, w2, b2), params = init_params(k3, 256, 256, 1)
    x = jax.random.normal(k4, (1024, 256), jnp.float32)
    out = jax.block_until_ready(simple_double_model(x, params))
    ref = ref_forward(x, w1, b1, w2, b2)
    assert out.shape == (1024, 1)
    assert jnp.allclose(out, ref, atol=5e-3, rtol=5e-3)

    # 3) Large batch, wide output, bf16 MXU operands -> batch-tiled wide path.
    (w1, b1, w2, b2), params = init_params(k5, 256, 256, 128, use_bf16=True)
    x = jax.random.normal(k6, (512, 256), jnp.float32)
    out = jax.block_until_ready(simple_double_model(x, params))
    ref = ref_forward(x, w1, b1, w2, b2, mm_dtype=jnp.bfloat16)
    assert out.shape == (512, 128)
    assert jnp.allclose(out, ref, atol=5e-3, rtol=5e-3)

    print("KERNEL_OK")
</pallas_src>

<mosaic_0001>
module attributes {stable_mosaic.version = 11 : i64} {
  func.func @_mlp_kernel_narrow_small(%arg0: memref<8x32xf32, #tpu.memory_space<vmem>>, %arg1: memref<32x32xf32, #tpu.memory_space<vmem>>, %arg2: memref<1x32xf32, #tpu.memory_space<vmem>>, %arg3: memref<1x32xf32, #tpu.memory_space<vmem>>, %arg4: memref<1xf32, #tpu.memory_space<smem>>, %arg5: memref<8x1xf32, #tpu.memory_space<vmem>>) attributes {dimension_semantics = [], scalar_prefetch = 0 : i64, scratch_operands = 0 : i64, tpu.core_type = #tpu.core_type<tc>} {
    %c0 = arith.constant 0 : index
    %c0_0 = arith.constant 0 : index
    %0 = vector.load %arg0[%c0, %c0_0] : memref<8x32xf32, #tpu.memory_space<vmem>>, vector<8x32xf32>
    %c0_1 = arith.constant 0 : index
    %c0_2 = arith.constant 0 : index
    %1 = vector.load %arg1[%c0_1, %c0_2] : memref<32x32xf32, #tpu.memory_space<vmem>>, vector<32x32xf32>
    %cst = arith.constant dense<0.000000e+00> : vector<8x32xf32>
    %2 = tpu.matmul %0, %1, %cst {dimension_numbers = #tpu.dot_dimension_numbers<[1], [0], [0], [1], [0, 0, 1, 1], [], []>} : vector<8x32xf32>, vector<32x32xf32>, vector<8x32xf32> -> vector<8x32xf32>
    %c0_3 = arith.constant 0 : index
    %c0_4 = arith.constant 0 : index
    %3 = vector.load %arg2[%c0_3, %c0_4] : memref<1x32xf32, #tpu.memory_space<vmem>>, vector<1x32xf32>
    %4 = vector.broadcast %3 : vector<1x32xf32> to vector<8x32xf32>
    %5 = arith.addf %2, %4 : vector<8x32xf32>
    %cst_5 = arith.constant 0.000000e+00 : f32
    %6 = vector.broadcast %cst_5 : f32 to vector<8x32xf32>
    %7 = arith.maximumf %5, %6 : vector<8x32xf32>
    %c0_6 = arith.constant 0 : index
    %c0_7 = arith.constant 0 : index
    %8 = vector.load %arg3[%c0_6, %c0_7] : memref<1x32xf32, #tpu.memory_space<vmem>>, vector<1x32xf32>
    %9 = vector.broadcast %8 : vector<1x32xf32> to vector<8x32xf32>
    %10 = arith.mulf %7, %9 : vector<8x32xf32>
    %cst_8 = arith.constant dense<0.000000e+00> : vector<8xf32>
    %11 = vector.multi_reduction <add>, %10, %cst_8 [1] : vector<8x32xf32> to vector<8xf32>
    %12 = vector.shape_cast %11 : vector<8xf32> to vector<8x1xf32>
    %c0_9 = arith.constant 0 : index
    %13 = memref.load %arg4[%c0_9] : memref<1xf32, #tpu.memory_space<smem>>
    %14 = vector.broadcast %13 : f32 to vector<8x1xf32>
    %15 = arith.addf %12, %14 : vector<8x1xf32>
    %c0_10 = arith.constant 0 : index
    %c0_11 = arith.constant 0 : index
    %16 = vector.load %arg5[%c0_10, %c0_11] : memref<8x1xf32, #tpu.memory_space<vmem>>, vector<8x1xf32>
    tpu.vector_store %arg5[%c0_10, %c0_11], %15 {strides = array<i32>} : memref<8x1xf32, #tpu.memory_space<vmem>>, vector<8x1xf32>,
    return
  }
}

</mosaic_0001>

<llo_original>
// kernel: tpu_custom_call.1
$region0: #{tpu_custom_call.1}
  #allocation0 [shape = 'u32[]', space=smem, size = 0x4, offset = 0x4, fixed_abs, tag = 'smem constant byte address 0x4 - core index']
  #allocation1 [shape = 'u32[72,128]{1,0:T(1,128)}', space=vmem, size = 0x9000, scoped, tag = 'internal scratch']
  #allocation2 [shape = 'f32[1]{0:T(128)S(6)}', space=smem, size = 0x200, scoped, tag = 'scoped memory for tpu_custom_call.1']
  %s0 = inlined_call_operand.hbm [shape: f32[8,32], index: 0, kind: input, shape index: {}]
  %s1 = inlined_call_operand.hbm [shape: f32[32,32], index: 1, kind: input, shape index: {}]
  %s2 = inlined_call_operand.vmem [shape: f32[1,32], index: 2, kind: input, shape index: {}]
  %s3 = inlined_call_operand.vmem [shape: f32[1,32], index: 3, kind: input, shape index: {}]
  %s4 = inlined_call_operand.<no memory space> [shape: f32[1], index: 4, kind: input, shape index: {}]
  %s5 = inlined_call_operand.vmem [shape: f32[8,1], index: 5, kind: output, shape index: {}]
  %s6 = sld [smem:[#allocation0]]
  $region38: #{tpu_custom_call.1} parent=0
    _
  %s8 = ssub.s32 1, %s6
  %s9 = scalar_select 0, %s8, %s6
  %10 = sst [smem:[#allocation2]] %s4
  $region1: #{tpu_custom_call.1} parent=0
    #allocation3 [shape = 'u8[4096]{0}', space=vmem, size = 0x1000, scoped, tag = 'input window, operand 0, single buffered']
    #allocation4 [shape = 's32[1]{0}', space=sflag, size = 0x4, scoped, tag = 'scoped memory for tpu_custom_call.1']
    #allocation5 [shape = 'u8[16384]{0}', space=vmem, size = 0x4000, scoped, tag = 'input window, operand 1, single buffered']
    #allocation6 [shape = 's32[1]{0}', space=sflag, size = 0x4, scoped, tag = 'scoped memory for tpu_custom_call.1']
    %11 = vsyncpa [#allocation4], 0
    %12 = vsyncpa [#allocation6], 0
    // Predicated region
    $region2: #{tpu_custom_call.1} parent=1 // pred_check
      _
    $region3: #{tpu_custom_call.1} parent=1 // pred_check_branch
      %14 = sbr.rel (0) target = $region5
    $region4: #{tpu_custom_call.1} parent=1 // pred_region
      %16 = vsyncadd [#allocation4], 0
      %s18 = sshll.u32 %s0, 4
      %s19 = int_to_ptr.hbm [resolvable:$true] %s18
      %s20 = sshll.u32 [#allocation3], 4
      %s21 = int_to_ptr.vmem [resolvable:$true] %s20
      %23 = dma.hbm_to_vmem [thread:$0]  %s19, 128, %s21, [#allocation4]
    $region5: #{tpu_custom_call.1} parent=1 // pred_fallthru
      _
    // Predicated region
    $region6: #{tpu_custom_call.1} parent=1 // pred_check
      _
    $region7: #{tpu_custom_call.1} parent=1 // pred_check_branch
      %25 = sbr.rel (0) target = $region9
    $region8: #{tpu_custom_call.1} parent=1 // pred_region
      %27 = vsyncadd [#allocation6], 0
      %s28 = sshll.u32 %s1, 4
      %s29 = int_to_ptr.hbm [resolvable:$true] %s28
      %s30 = sshll.u32 [#allocation5], 4
      %s31 = int_to_ptr.vmem [resolvable:$true] %s30
      %36 = dma.hbm_to_vmem [thread:$0]  %s29, 512, %s31, [#allocation6], 128, 128, 8
    $region9: #{tpu_custom_call.1} parent=1 // pred_fallthru
      _
    // Predicated region
    $region10: #{tpu_custom_call.1} parent=1 // pred_check
      _
    $region11: #{tpu_custom_call.1} parent=1 // pred_check_branch
      %38 = sbr.rel (0) target = $region13
    $region12: #{tpu_custom_call.1} parent=1 // pred_region
      _
    $region13: #{tpu_custom_call.1} parent=1 // pred_fallthru
      _
    // Predicated region
    $region14: #{tpu_custom_call.1} parent=1 // pred_check
      _
    $region15: #{tpu_custom_call.1} parent=1 // pred_check_branch
      %40 = sbr.rel (0) target = $region17
    $region16: #{tpu_custom_call.1} parent=1 // pred_region
      _
    $region17: #{tpu_custom_call.1} parent=1 // pred_fallthru
      _
    // Predicated region
    $region18: #{tpu_custom_call.1} parent=1 // pred_check
      _
    $region19: #{tpu_custom_call.1} parent=1 // pred_check_branch
      %42 = sbr.rel (0) target = $region21
    $region20: #{tpu_custom_call.1} parent=1 // pred_region
      _
    $region21: #{tpu_custom_call.1} parent=1 // pred_fallthru
      _
    // Predicated region
    $region22: #{tpu_custom_call.1} parent=1 // pred_check
      _
    $region23: #{tpu_custom_call.1} parent=1 // pred_check_branch
      %44 = sbr.rel (0) target = $region25
    $region24: #{tpu_custom_call.1} parent=1 // pred_region
      %46 = dma.done [#allocation4], 128
    $region25: #{tpu_custom_call.1} parent=1 // pred_fallthru
      _
    // Predicated region
    $region26: #{tpu_custom_call.1} parent=1 // pred_check
      _
    $region27: #{tpu_custom_call.1} parent=1 // pred_check_branch
      %48 = sbr.rel (0) target = $region29
    $region28: #{tpu_custom_call.1} parent=1 // pred_region
      %50 = dma.done [#allocation6], 512
    $region29: #{tpu_custom_call.1} parent=1 // pred_fallthru
      _
    %v51 = vld [vmem:[#allocation3] sm:$0xff]
    %v52 = vld [vmem:[#allocation5] sm:$0xff]
    %v53 = vld [vmem:[#allocation5 + $0x8] sm:$0xff]
    %v54 = vld [vmem:[#allocation5 + $0x10] sm:$0xff]
    %v55 = vld [vmem:[#allocation5 + $0x18] sm:$0xff]
    %v56 = vld [vmem:[%s2] sm:$0x1]
    %v58 = vperm.slane %v56, 0
    %vm60 = vcmask 261120
    %v62 = vsel %vm60, %v51, 0
    %64 = vmatpush.msra.mxu0 0.0
    %65 = vmatpush.msra.mxu0 0.0
    %66 = vmatpush.msra.mxu0 0.0
    %67 = vmatpush.msra.mxu0 0.0
    %68 = vmatpush.msra.mxu0 0.0
    %69 = vmatpush.msra.mxu0 0.0
    %70 = vmatpush.msra.mxu0 0.0
    %71 = vmatpush.msra.mxu0 0.0
    %72 = vmatpush.msra.mxu0 0.0
    %73 = vmatpush.msra.mxu0 0.0
    %74 = vmatpush.msra.mxu0 0.0
    %75 = vmatpush.msra.mxu0 0.0
    %76 = vmatpush.msra.mxu0 %v55
    %77 = vmatpush.msra.mxu0 %v54
    %78 = vmatpush.msra.mxu0 %v53
    %79 = vmatpush.msra.mxu0 %v52
    %80 = vmatmul.f32.gmra.mxu0 %v62
    %v81 = vpop.f32.mrf.mxu0
    %v82 = vadd.f32 %v58, %v81
    %83 = vdwg.mxu0
    %v84 = vmax.f32 %v82, 0.0
    %v85 = vld [vmem:[%s3] sm:$0x1]
    %v87 = vperm.slane %v85, 0
    %v89 = vmul.f32 %v84, %v87
    %v90 = vsel %vm60, %v89, 0.0
    %91 = vadd.xlane.f32.xlu0 %v90
    %v92 = vpop.xlane.xlu0 %91
    %s93 = sld [smem:[#allocation2]]
    %v94 = vstv %s93
    %v95 = vadd.f32 %v92, %v94
    %vm96 = vcmask 7168
    %97 = vst.msk [vmem:[%s5] sm:$0xff] %vm96, %v95
    // Predicated region
    $region30: #{tpu_custom_call.1} parent=1 // pred_check
      _
    $region31: #{tpu_custom_call.1} parent=1 // pred_check_branch
      %99 = sbr.rel (0) target = $region33
    $region32: #{tpu_custom_call.1} parent=1 // pred_region
      _
    $region33: #{tpu_custom_call.1} parent=1 // pred_fallthru
      _
    // Predicated region
    $region34: #{tpu_custom_call.1} parent=1 // pred_check
      _
    $region35: #{tpu_custom_call.1} parent=1 // pred_check_branch
      %101 = sbr.rel (0) target = $region37
    $region36: #{tpu_custom_call.1} parent=1 // pred_region
      _
    $region37: #{tpu_custom_call.1} parent=1 // pred_fallthru
      _
    %102 = vsyncpa [#allocation4], 1
    %103 = vsyncpa [#allocation6], 1

</llo_original>
